<compile_context>
chip_gen: v5e
topology: v5e:2x2
jax: 0.10.0
libtpu: 0.0.40
codegen_flags: <defaults>
</compile_context>

<pallas_src>
import functools

import jax
import jax.numpy as jnp
import numpy as np
from jax import lax
from jax.experimental import pallas as pl
from jax.experimental.pallas import tpu as pltpu

_LANE = 128


def _round_up(x, m):
    return (x + m - 1) // m * m


def _tpu_generation():
    """Best-effort TPU generation (5/6/7); 0 if unknown."""
    try:
        kind = jax.devices()[0].device_kind.lower()
    except Exception:
        return 0
    for g in (7, 6, 5):
        if f"v{g}" in kind:
            return g
    return 0


# ----------------------------------------------------------------------------
# Kernels
# ----------------------------------------------------------------------------
def _conv3x3_s2_im2col_kernel(x_ref, w_ref, b_ref, o_ref):
    """One (cout-tile, batch, pixel-tile) grid step.

    x_ref: (1, TM, K)   im2col rows; K = 9*Cin (all 9 taps stacked into channels)
    w_ref: (K, TN)      lane-dense weight slab
    b_ref: (1, TN)      f32 bias
    o_ref: (1, TM, TN)

    Single MXU dot with K = 9*Cin: no per-tap accumulator RMW, no in-kernel
    slicing / reshaping / relayouts.  bf16 operands go straight to the MXU with
    f32 accumulation.
    """
    acc = jnp.dot(x_ref[0], w_ref[...], preferred_element_type=jnp.float32)
    o_ref[0] = (acc + b_ref[...]).astype(o_ref.dtype)


def _avgpool2x2_kernel(x_ref, o_ref, *, acc_dtype):
    """x_ref: (1, TH, 2, WO, 2C) row-paired / column-interleaved view.
    o_ref: (1, TH, WO, C).  Pure contiguous adds — no strided loads."""
    c = o_ref.shape[3]
    v = x_ref[0].astype(acc_dtype)          # (TH, 2, WO, 2C)
    s = v[:, 0] + v[:, 1]                   # pair rows    -> (TH, WO, 2C)
    out = (s[..., :c] + s[..., c:]) * 0.25  # pair columns -> (TH, WO, C)
    o_ref[0] = out.astype(o_ref.dtype)


# ----------------------------------------------------------------------------
# NHWC entry points (production path: no layout transposes)
# ----------------------------------------------------------------------------
@functools.partial(jax.jit, static_argnames=("compute_dtype",))
def downsample_conv_nhwc(x, w_hwio, bias, compute_dtype=None):
    """Conv2d(k=3, stride=2, pad=1).  x: (N,H,W,Cin) NHWC, w: (3,3,Cin,Cout) HWIO."""
    n, h, w, cin = x.shape
    kh_, kw_, cin_w, cout = w_hwio.shape
    assert (kh_, kw_) == (3, 3) and cin_w == cin
    ho = (h - 1) // 2 + 1
    wo = (w - 1) // 2 + 1
    p_pix = ho * wo
    k9 = 9 * cin
    gen = _tpu_generation()

    orig_dtype = x.dtype
    if compute_dtype is None:
        # bf16 is MXU-native on v5e/v6e/v7x and halves input/weight HBM+VMEM bytes.
        compute_dtype = jnp.bfloat16 if x.dtype == jnp.float32 else x.dtype
    xc = x.astype(compute_dtype)
    wc = w_hwio.astype(compute_dtype)
    isz = jnp.dtype(compute_dtype).itemsize

    # ---- im2col prep (one fused XLA pass): all 9 taps stacked into the channel dim so
    # the kernel does a single dense dot.  Tap order (kh, kw) matches the weight reshape.
    xp = jnp.pad(xc, ((0, 0), (1, 1), (1, 1), (0, 0)))
    taps = []
    for kh in range(3):
        for kw in range(3):
            taps.append(xp[:, kh:kh + 2 * ho - 1:2, kw:kw + 2 * wo - 1:2, :])
    xprep = jnp.concatenate(taps, axis=-1).reshape(n, p_pix, k9)   # (N, Ho*Wo, 9*Cin)

    # ---- Cout tiling: single resident tile when small; 256-wide on v6e/v7x, 128 on v5e.
    cout_128 = _round_up(cout, _LANE)
    if cout_128 <= 512:
        tn = cout_128                      # one cout tile -> weights resident across the grid
    else:
        tn = 256 if gen >= 6 else _LANE    # v6e/v7x MXU is 256-wide; v5e is 128-wide
    cout_p = _round_up(cout, tn)
    n_j = cout_p // tn

    w2 = wc.reshape(k9, cout)              # [(kh*3+kw)*cin + ci, co] — matches tap order
    b2 = bias.astype(jnp.float32).reshape(1, cout)
    if cout_p != cout:
        w2 = jnp.pad(w2, ((0, 0), (0, cout_p - cout)))
        b2 = jnp.pad(b2, ((0, 0), (0, cout_p - cout)))

    # ---- Pixel-row tile TM: bounded by the f32 dot-result budget and the input block
    # budget (per generation); multiple of 8 for clean sublane tiling.
    acc_budget = (256 << 10) if gen == 7 else (512 << 10)
    in_budget = (5 << 20) if gen == 7 else ((12 << 20) if gen in (5, 6) else (8 << 20))
    tm = min(acc_budget // (tn * 4), in_budget // max(1, k9 * isz), _round_up(p_pix, 8))
    tm = max(8, (int(tm) // 8) * 8)
    n_p = pl.cdiv(p_pix, tm)

    # Cout tile OUTERMOST so the weight slab is DMA'd once per cout tile, not per step.
    grid = (n_j, n, n_p)

    out_isz = jnp.dtype(orig_dtype).itemsize
    blk = tm * k9 * isz + k9 * tn * isz + tn * 4 + tm * tn * out_isz
    need = 2 * blk + tm * tn * 4 + (4 << 20)
    cap = {5: 96 << 20, 6: 96 << 20, 7: 48 << 20}.get(gen, 64 << 20)
    vmem_limit = int(min(cap, max(32 << 20, need)))

    flops = 2 * n * p_pix * k9 * cout_p
    bytes_accessed = int((n * p_pix * k9 + k9 * cout_p) * isz + cout_p * 4
                         + n * p_pix * cout * out_isz)

    out = pl.pallas_call(
        _conv3x3_s2_im2col_kernel,
        # Output last dim is the TRUE cout (edge cout tile is masked by Pallas):
        # no padded output and no post-call slice / extra HBM pass.
        out_shape=jax.ShapeDtypeStruct((n, p_pix, cout), orig_dtype),
        grid=grid,
        in_specs=[
            pl.BlockSpec((1, tm, k9), lambda j, b, p: (b, p, 0)),
            pl.BlockSpec((k9, tn), lambda j, b, p: (0, j)),
            pl.BlockSpec((1, tn), lambda j, b, p: (0, j)),
        ],
        out_specs=pl.BlockSpec((1, tm, tn), lambda j, b, p: (b, p, j)),
        compiler_params=pltpu.CompilerParams(
            dimension_semantics=("parallel", "parallel", "parallel"),
            vmem_limit_bytes=vmem_limit,
            allow_input_fusion=[True, False, False],
        ),
        cost_estimate=pl.CostEstimate(
            flops=flops, transcendentals=0, bytes_accessed=bytes_accessed),
    )(xprep, w2, b2)

    return out.reshape(n, ho, wo, cout)


@jax.jit
def downsample_avgpool_nhwc(x):
    """AvgPool2d(2, 2).  x: (N,H,W,C) NHWC.  Odd trailing row/col dropped (torch default)."""
    n, h, w, c = x.shape
    ho, wo = h // 2, w // 2
    gen = _tpu_generation()
    xc = x[:, :2 * ho, :2 * wo, :]
    # Memory-order-preserving reshape: row pairs on an outer dim, column pairs interleaved
    # into the lane dim, so the kernel needs only contiguous adds (no strided loads).
    xr = xc.reshape(n, ho, 2, wo, 2 * c)

    # bf16 adds on v6e/v7x (bf16-native VPU); f32 on v5e or for f32 inputs.
    acc_dtype = x.dtype if (x.dtype == jnp.bfloat16 and gen >= 6) else jnp.float32

    isz = jnp.dtype(x.dtype).itemsize
    in_budget = (8 << 20) if gen == 7 else (16 << 20) if gen in (5, 6) else (8 << 20)
    th = int(max(1, min(ho, in_budget // max(1, 2 * wo * 2 * c * isz))))
    grid = (n, pl.cdiv(ho, th))

    return pl.pallas_call(
        functools.partial(_avgpool2x2_kernel, acc_dtype=acc_dtype),
        out_shape=jax.ShapeDtypeStruct((n, ho, wo, c), x.dtype),
        grid=grid,
        in_specs=[pl.BlockSpec((1, th, 2, wo, 2 * c), lambda b, r: (b, r, 0, 0, 0))],
        out_specs=pl.BlockSpec((1, th, wo, c), lambda b, r: (b, r, 0, 0)),
        compiler_params=pltpu.CompilerParams(
            dimension_semantics=("parallel", "parallel"),
            allow_input_fusion=[True],
        ),
        cost_estimate=pl.CostEstimate(
            flops=4 * n * ho * wo * c, transcendentals=0,
            bytes_accessed=int((n * ho * 2 * wo * 2 * c + n * ho * wo * c) * isz)),
    )(xr)


# ----------------------------------------------------------------------------
# NCHW drop-in shims (PyTorch layout parity only — prefer the NHWC entry points;
# these per-call transposes are exactly the HBM passes the NHWC path removes).
# ----------------------------------------------------------------------------
def downsample_conv_nchw(x_nchw, w_oihw, bias):
    x = jnp.transpose(x_nchw, (0, 2, 3, 1))
    w_hwio = jnp.transpose(w_oihw, (2, 3, 1, 0))
    y = downsample_conv_nhwc(x, w_hwio, bias)
    return jnp.transpose(y, (0, 3, 1, 2))


def downsample_avgpool_nchw(x_nchw):
    y = downsample_avgpool_nhwc(jnp.transpose(x_nchw, (0, 3, 1, 2)))
    return jnp.transpose(y, (0, 3, 1, 2))


# ----------------------------------------------------------------------------
# Main
# ----------------------------------------------------------------------------
if __name__ == "__main__":
    key = jax.random.PRNGKey(0)
    kx, kw_key, kb_key, ki = jax.random.split(key, 4)

    # Downsample(channels=4, use_conv=True, dims=2, out_channels=8)
    N, H, W, CIN, COUT = 2, 16, 16, 4, 8
    x_nchw = jax.random.normal(kx, (N, CIN, H, W), jnp.float32)      # module-spec layout
    x = jnp.transpose(x_nchw, (0, 2, 3, 1))                          # NHWC production layout
    fan_in = CIN * 9
    bound = 1.0 / np.sqrt(fan_in)
    w_hwio = jax.random.uniform(kw_key, (3, 3, CIN, COUT), jnp.float32, -bound, bound)
    b = jax.random.uniform(kb_key, (COUT,), jnp.float32, -bound, bound)

    # --- use_conv=True: bf16 MXU compute / f32 accumulation vs matched-precision XLA conv.
    out = jax.block_until_ready(downsample_conv_nhwc(x, w_hwio, b))
    ref = lax.conv_general_dilated(
        x.astype(jnp.bfloat16), w_hwio.astype(jnp.bfloat16),
        window_strides=(2, 2), padding=((1, 1), (1, 1)),
        dimension_numbers=("NHWC", "HWIO", "NHWC"),
        preferred_element_type=jnp.float32) + b
    assert out.shape == (N, H // 2, W // 2, COUT), out.shape
    np.testing.assert_allclose(np.asarray(out), np.asarray(ref), rtol=1e-3, atol=1e-3)

    # --- Exactness / indexing check: integer-valued data is exact in bf16, so any
    # tap/stride/padding indexing bug shows up as a hard mismatch (not tolerance slack).
    xi = jnp.round(jax.random.uniform(ki, (N, H, W, CIN), jnp.float32, -4.0, 4.0))
    wi = jnp.round(w_hwio * 64.0) / 8.0
    bi = jnp.round(b * 64.0) / 8.0
    out_i = jax.block_until_ready(downsample_conv_nhwc(xi, wi, bi))
    ref_i = lax.conv_general_dilated(
        xi, wi, window_strides=(2, 2), padding=((1, 1), (1, 1)),
        dimension_numbers=("NHWC", "HWIO", "NHWC"),
        preferred_element_type=jnp.float32) + bi
    np.testing.assert_allclose(np.asarray(out_i), np.asarray(ref_i), rtol=0, atol=1e-5)

    # --- PyTorch-layout (NCHW / OIHW) drop-in parity.
    w_oihw = jnp.transpose(w_hwio, (3, 2, 0, 1))
    out_nchw = jax.block_until_ready(downsample_conv_nchw(x_nchw, w_oihw, b))
    np.testing.assert_allclose(np.asarray(out_nchw),
                               np.asarray(jnp.transpose(ref, (0, 3, 1, 2))),
                               rtol=1e-3, atol=1e-3)

    # --- use_conv=False: Downsample(channels=4, use_conv=False, dims=2) -> AvgPool2d(2, 2)
    out_pool = jax.block_until_ready(downsample_avgpool_nhwc(x))
    ref_pool = x.reshape(N, H // 2, 2, W // 2, 2, CIN).mean(axis=(2, 4))
    assert out_pool.shape == (N, H // 2, W // 2, CIN), out_pool.shape
    np.testing.assert_allclose(np.asarray(out_pool), np.asarray(ref_pool),
                               rtol=1e-5, atol=1e-6)

    print("KERNEL_OK")
</pallas_src>

<mosaic_0001>
module attributes {stable_mosaic.version = 11 : i64} {
  func.func @_conv3x3_s2_im2col_kernel(%arg0: i32, %arg1: i32, %arg2: i32, %arg3: memref<1x64x36xbf16, #tpu.memory_space<vmem>>, %arg4: memref<36x128xbf16, #tpu.memory_space<vmem>>, %arg5: memref<1x128xf32, #tpu.memory_space<vmem>>, %arg6: memref<1x64x128xf32, #tpu.memory_space<vmem>>) attributes {dimension_semantics = [#tpu.dimension_semantics<parallel>, #tpu.dimension_semantics<parallel>, #tpu.dimension_semantics<parallel>], iteration_bounds = array<i64: 1, 2, 1>, scalar_prefetch = 0 : i64, scratch_operands = 0 : i64, tpu.core_type = #tpu.core_type<tc>, window_params = [{transform_indices = @transform_0, window_bounds = array<i64: 1, 64, 36>}, {transform_indices = @transform_1, window_bounds = array<i64: 36, 128>}, {transform_indices = @transform_2, window_bounds = array<i64: 1, 128>}, {transform_indices = @transform_3, window_bounds = array<i64: 1, 64, 128>}]} {
    %c0 = arith.constant 0 : index
    %c0_0 = arith.constant 0 : index
    %c0_1 = arith.constant 0 : index
    %0 = vector.load %arg3[%c0, %c0_0, %c0_1] : memref<1x64x36xbf16, #tpu.memory_space<vmem>>, vector<1x64x36xbf16>
    %1 = vector.shape_cast %0 : vector<1x64x36xbf16> to vector<64x36xbf16>
    %c0_2 = arith.constant 0 : index
    %c0_3 = arith.constant 0 : index
    %2 = vector.load %arg4[%c0_2, %c0_3] : memref<36x128xbf16, #tpu.memory_space<vmem>>, vector<36x128xbf16>
    %cst = arith.constant dense<0.000000e+00> : vector<64x128xf32>
    %3 = tpu.matmul %1, %2, %cst {dimension_numbers = #tpu.dot_dimension_numbers<[1], [0], [0], [1], [0, 0, 1, 1], [], []>} : vector<64x36xbf16>, vector<36x128xbf16>, vector<64x128xf32> -> vector<64x128xf32>
    %c0_4 = arith.constant 0 : index
    %c0_5 = arith.constant 0 : index
    %4 = vector.load %arg5[%c0_4, %c0_5] : memref<1x128xf32, #tpu.memory_space<vmem>>, vector<1x128xf32>
    %5 = vector.broadcast %4 : vector<1x128xf32> to vector<64x128xf32>
    %6 = arith.addf %3, %5 : vector<64x128xf32>
    %c0_6 = arith.constant 0 : index
    %c0_7 = arith.constant 0 : index
    %c0_8 = arith.constant 0 : index
    %7 = vector.load %arg6[%c0_6, %c0_7, %c0_8] : memref<1x64x128xf32, #tpu.memory_space<vmem>>, vector<1x64x128xf32>
    %8 = vector.shape_cast %7 : vector<1x64x128xf32> to vector<64x128xf32>
    %9 = vector.shape_cast %6 : vector<64x128xf32> to vector<1x64x128xf32>
    tpu.vector_store %arg6[%c0_6, %c0_7, %c0_8], %9 {strides = array<i32>} : memref<1x64x128xf32, #tpu.memory_space<vmem>>, vector<1x64x128xf32>,
    return
  }
  func.func @transform_0(%arg0: i32, %arg1: i32, %arg2: i32) -> (i32, i32, i32) {
    %c0_i32 = arith.constant 0 : i32
    %c0_i32_0 = arith.constant 0 : i32
    return %arg1, %arg2, %c0_i32 : i32, i32, i32
  }
  func.func @transform_1(%arg0: i32, %arg1: i32, %arg2: i32) -> (i32, i32) {
    %c0_i32 = arith.constant 0 : i32
    %c0_i32_0 = arith.constant 0 : i32
    return %c0_i32, %arg0 : i32, i32
  }
  func.func @transform_2(%arg0: i32, %arg1: i32, %arg2: i32) -> (i32, i32) {
    %c0_i32 = arith.constant 0 : i32
    %c0_i32_0 = arith.constant 0 : i32
    return %c0_i32, %arg0 : i32, i32
  }
  func.func @transform_3(%arg0: i32, %arg1: i32, %arg2: i32) -> (i32, i32, i32) {
    %c0_i32 = arith.constant 0 : i32
    return %arg1, %arg2, %arg0 : i32, i32, i32
  }
}

</mosaic_0001>

<llo_original>
// kernel: downsample_conv_nhwc.2
$region0: #{downsample_conv_nhwc.2}
  #allocation0 [shape = 'u32[]', space=smem, size = 0x4, offset = 0x4, fixed_abs, tag = 'smem constant byte address 0x4 - core index']
  #allocation1 [shape = 'u32[72,128]{1,0:T(1,128)}', space=vmem, size = 0x9000, scoped, tag = 'internal scratch']
  %s0 = inlined_call_operand.vmem [shape: bf16[36,128], index: 0, kind: input, shape index: {}]
  %s1 = inlined_call_operand.vmem [shape: f32[1,128], index: 1, kind: input, shape index: {}]
  %s2 = inlined_call_operand.vmem [shape: bf16[2,8,8,36], index: 2, kind: input, shape index: {}]
  %s3 = inlined_call_operand.hbm [shape: f32[2,64,8], index: 3, kind: output, shape index: {}]
  %s4 = sld [smem:[#allocation0]]
  $region45: #{downsample_conv_nhwc.2} parent=0
    _
  %s6 = ssub.s32 1, %s4
  %s7 = scalar_select 0, %s6, %s4
  $region1: #{downsample_conv_nhwc.2} parent=0
    #allocation2 [shape = 'u8[65536]{0}', space=vmem, size = 0x10000, scoped, tag = 'output window, operand 0']
    #allocation3 [shape = 's32[2]{0}', space=sflag, size = 0x8, scoped, tag = 'scoped memory for downsample_conv_nhwc.2']
    %8 = vsyncpa [#allocation3], 0
    %s9 = scalar_lea.sflag [#allocation3], 1
    %10 = vsyncpa %s9, 0
    loop: start=0, step=1, limit=4
    $region2: #{downsample_conv_nhwc.2} parent=1 // loop_pre_header
      _
    $region3: #{downsample_conv_nhwc.2} parent=1 // loop_header
      %s12 = sphi 0, %s16
      %p13 = scmp.ge.s32.totalorder %s12, 4
      %s19 = sphi 0, %s38
      %s20 = sphi 0, %s34
      %s21 = sphi 0, %s30
      %s22 = sphi 0, %s19
      %s23 = sphi 0, %s20
      %s24 = sphi 0, %s21
      %s25 = sphi 0, %s22
      %s26 = sphi 0, %s23
      %s27 = sphi 0, %s24
      %s43 = sphi 0, %s45
      %s46 = sphi 0, %s43
      %s47 = sphi 0, %s46
      %s63 = sphi 0, %s47
      %s69 = sphi 0, %s71
      %s72 = sphi 0, %s69
      %s73 = sphi 0, %s72
      %s89 = sphi 0, %s73
      %s95 = sphi 0, %s97
      %s98 = sphi 0, %s95
      %s99 = sphi 0, %s98
      %s115 = sphi 0, %s99
      %s125 = sphi 0, %s127
      %s128 = sphi 0, %s125
      %s129 = sphi 0, %s128
      %s145 = sphi 0, %s129
    $region4: #{downsample_conv_nhwc.2} parent=1 // loop_header_branch
      %15 = sbr.rel (%p13) target = $region8
    $region5: #{downsample_conv_nhwc.2} parent=1 // loop_body
      %s17 = ssub.s32 %s12, 1
      %s18 = ssub.s32 %s12, 2
      %s28 = sadd.s32 1, %s21
      %p29 = scmp.ge.s32.totalorder %s28, 1
      %s30 = scalar_select %p29, 0, %s28
      %s31 = sadd.s32 1, %s20
      %s32 = scalar_select %p29, %s31, %s20
      %p33 = scmp.ge.s32.totalorder %s32, 2
      %s34 = scalar_select %p33, 0, %s32
      %s35 = sadd.s32 1, %s19
      %s36 = scalar_select %p33, %s35, %s19
      %p37 = scmp.ge.s32.totalorder %s36, 1
      %s38 = scalar_select %p37, 0, %s36
      %s39 = ssub.s32 %s20, %s34
      %s40 = ssub.s32 %s21, %s30
      %s41 = sor.u32 %s39, %s40
      %p42 = scmp.eq.s32.totalorder %s41, 0
      %s44 = sadd.s32 %s43, 1
      %s45 = scalar_select %p42, %s43, %s44
      %p48 = pneg %p42
      %p49 = scmp.eq.s32.totalorder %s12, 1
      %p50 = por %p48, %p49
      %p51 = scmp.ne.s32.totalorder %s43, %s46
      %p52 = scmp.eq.s32.totalorder %s12, 0
      %p53 = por %p51, %p52
      %p54 = scmp.ne.s32.totalorder %s43, %s46
      %p55 = scmp.eq.s32.totalorder %s17, 1
      %p56 = por %p54, %p55
      %p57 = scmp.ne.s32.totalorder %s46, %s47
      %p58 = scmp.eq.s32.totalorder %s17, 0
      %p59 = por %p57, %p58
      %p60 = scmp.ne.s32.totalorder %s46, %s47
      %p61 = scmp.eq.s32.totalorder %s18, 1
      %p62 = por %p60, %p61
      %p64 = scmp.ne.s32.totalorder %s47, %s63
      %p65 = scmp.eq.s32.totalorder %s18, 0
      %p66 = por %p64, %p65
      %s67 = ssub.s32 %s19, %s38
      %p68 = scmp.eq.s32.totalorder %s67, 0
      %s70 = sadd.s32 %s69, 1
      %s71 = scalar_select %p68, %s69, %s70
      %p74 = pneg %p68
      %p75 = scmp.eq.s32.totalorder %s12, 1
      %p76 = por %p74, %p75
      %p77 = scmp.ne.s32.totalorder %s69, %s72
      %p78 = scmp.eq.s32.totalorder %s12, 0
      %p79 = por %p77, %p78
      %p80 = scmp.ne.s32.totalorder %s69, %s72
      %p81 = scmp.eq.s32.totalorder %s17, 1
      %p82 = por %p80, %p81
      %p83 = scmp.ne.s32.totalorder %s72, %s73
      %p84 = scmp.eq.s32.totalorder %s17, 0
      %p85 = por %p83, %p84
      %p86 = scmp.ne.s32.totalorder %s72, %s73
      %p87 = scmp.eq.s32.totalorder %s18, 1
      %p88 = por %p86, %p87
      %p90 = scmp.ne.s32.totalorder %s73, %s89
      %p91 = scmp.eq.s32.totalorder %s18, 0
      %p92 = por %p90, %p91
      %s93 = ssub.s32 %s19, %s38
      %p94 = scmp.eq.s32.totalorder %s93, 0
      %s96 = sadd.s32 %s95, 1
      %s97 = scalar_select %p94, %s95, %s96
      %p100 = pneg %p94
      %p101 = scmp.eq.s32.totalorder %s12, 1
      %p102 = por %p100, %p101
      %p103 = scmp.ne.s32.totalorder %s95, %s98
      %p104 = scmp.eq.s32.totalorder %s12, 0
      %p105 = por %p103, %p104
      %p106 = scmp.ne.s32.totalorder %s95, %s98
      %p107 = scmp.eq.s32.totalorder %s17, 1
      %p108 = por %p106, %p107
      %p109 = scmp.ne.s32.totalorder %s98, %s99
      %p110 = scmp.eq.s32.totalorder %s17, 0
      %p111 = por %p109, %p110
      %p112 = scmp.ne.s32.totalorder %s98, %s99
      %p113 = scmp.eq.s32.totalorder %s18, 1
      %p114 = por %p112, %p113
      %p116 = scmp.ne.s32.totalorder %s99, %s115
      %p117 = scmp.eq.s32.totalorder %s18, 0
      %p118 = por %p116, %p117
      %s119 = ssub.s32 %s20, %s34
      %s120 = ssub.s32 %s21, %s30
      %s121 = sor.u32 %s119, %s120
      %s122 = ssub.s32 %s19, %s38
      %s123 = sor.u32 %s121, %s122
      %p124 = scmp.eq.s32.totalorder %s123, 0
      %s126 = sadd.s32 %s125, 1
      %s127 = scalar_select %p124, %s125, %s126
      %p130 = pneg %p124
      %p131 = scmp.eq.s32.totalorder %s12, 1
      %p132 = por %p130, %p131
      %p133 = scmp.ne.s32.totalorder %s125, %s128
      %p134 = scmp.eq.s32.totalorder %s12, 0
      %p135 = por %p133, %p134
      %p136 = scmp.ne.s32.totalorder %s125, %s128
      %p137 = scmp.eq.s32.totalorder %s17, 1
      %p138 = por %p136, %p137
      %p139 = scmp.ne.s32.totalorder %s128, %s129
      %p140 = scmp.eq.s32.totalorder %s17, 0
      %p141 = por %p139, %p140
      %p142 = scmp.ne.s32.totalorder %s128, %s129
      %p143 = scmp.eq.s32.totalorder %s18, 1
      %p144 = por %p142, %p143
      %p146 = scmp.ne.s32.totalorder %s129, %s145
      %p147 = scmp.eq.s32.totalorder %s18, 0
      %p148 = por %p146, %p147
      %p149 = scmp.le.s32.totalorder 1, %s12
      %p150 = scmp.lt.s32.totalorder %s12, 3
      %p151 = pnand %p149, %p150
      %p152 = pneg %p151
      // Predicated region
      $region9: #{downsample_conv_nhwc.2} parent=5 // pred_check
        _
      $region10: #{downsample_conv_nhwc.2} parent=5 // pred_check_branch
        %154 = sbr.rel (%p151) target = $region12
      $region11: #{downsample_conv_nhwc.2} parent=5 // pred_region
        %s155 = ssub.s32 %s12, 1
        // Predicated region
        $region13: #{downsample_conv_nhwc.2} parent=11 // pred_check
          %p156 = pneg %p85
        $region14: #{downsample_conv_nhwc.2} parent=11 // pred_check_branch
          %158 = sbr.rel (%p156) target = $region16
        $region15: #{downsample_conv_nhwc.2} parent=11 // pred_region
          %p159 = scmp.lt.s32.totalorder %s22, 0
          %s160 = scalar_select %p159, %s22, 0
          %s161 = smul.addr %s160, 4
          %s162 = scalar_lea.vmem %s0, %s161
        $region16: #{downsample_conv_nhwc.2} parent=11 // pred_fallthru
          _
        // Predicated region
        $region17: #{downsample_conv_nhwc.2} parent=11 // pred_check
          %p163 = pneg %p111
        $region18: #{downsample_conv_nhwc.2} parent=11 // pred_check_branch
          %165 = sbr.rel (%p163) target = $region20
        $region19: #{downsample_conv_nhwc.2} parent=11 // pred_region
          %p166 = scmp.lt.s32.totalorder %s22, 0
          %s167 = scalar_select %p166, %s22, 0
          %s168 = scalar_lea.vmem %s1, %s167
        $region20: #{downsample_conv_nhwc.2} parent=11 // pred_fallthru
          _
      $region12: #{downsample_conv_nhwc.2} parent=5 // pred_fallthru
        _
      %p169 = scmp.lt.s32.totalorder %s12, 2
      // Predicated region
      $region21: #{downsample_conv_nhwc.2} parent=5 // pred_check
        %p170 = pneg %p169
      $region22: #{downsample_conv_nhwc.2} parent=5 // pred_check_branch
        %172 = sbr.rel (%p170) target = $region24
      $region23: #{downsample_conv_nhwc.2} parent=5 // pred_region
        // Predicated region
        $region25: #{downsample_conv_nhwc.2} parent=23 // pred_check
          %p173 = pneg %p53
        $region26: #{downsample_conv_nhwc.2} parent=23 // pred_check_branch
          %175 = sbr.rel (%p173) target = $region28
        $region27: #{downsample_conv_nhwc.2} parent=23 // pred_region
          %s176 = smul.u32 8, %s21
          %p177 = scmp.lt.s32.totalorder %s20, 1
          %s178 = scalar_select %p177, %s20, 1
          %p179 = scmp.lt.s32.totalorder %s176, 7
          %s180 = scalar_select %p179, %s176, 7
          %s181 = smul.addr %s178, 8
          %s182 = sadd.s32 %s180, %s181
          %s183 = smul.addr %s182, 4
          %s184 = scalar_lea.vmem %s2, %s183
          %s185 = smul.u32 8, %s21
        $region28: #{downsample_conv_nhwc.2} parent=23 // pred_fallthru
          _
      $region24: #{downsample_conv_nhwc.2} parent=5 // pred_fallthru
        _
      %p186 = scmp.le.s32.totalorder 1, %s12
      %p187 = scmp.lt.s32.totalorder %s12, 3
      %p188 = pnand %p186, %p187
      %p189 = pneg %p188
      // Predicated region
      $region29: #{downsample_conv_nhwc.2} parent=5 // pred_check
        _
      $region30: #{downsample_conv_nhwc.2} parent=5 // pred_check_branch
        %191 = sbr.rel (%p188) target = $region32
      $region31: #{downsample_conv_nhwc.2} parent=5 // pred_region
        #allocation4 [shape = 'u8[16384]{0}', space=vmem, size = 0x4000, dematerialized = true, scoped, tag = 'FusionAdapter Buffer %fusion.1 = bf16[2,64,36]{2,1,0:T(8,128)(2,1)} fusion(%param_2.1), kind=kLoop, calls=%fused_computation.2.clone, metadata={op_name="jit(downsample_conv_nhwc)/reshape" stack_frame_id=11}']
        %s192 = ssub.s32 %s12, 1
        %s193 = smul.u32 8, %s24
        %p194 = scmp.lt.s32.totalorder %s23, 1
        %s195 = scalar_select %p194, %s23, 1
        %p196 = scmp.lt.s32.totalorder %s193, 7
        %s197 = scalar_select %p196, %s193, 7
        %s198 = smul.addr %s195, 8
        %s199 = sadd.s32 %s197, %s198
        %s200 = smul.addr %s199, 4
        %s201 = scalar_lea.vmem %s2, %s200
        %p202 = pneg %p59
        %p203 = pneg %p56
        %p204 = scmp.lt.s32.totalorder %s22, 0
        %s205 = scalar_select %p204, %s22, 0
        %s206 = smul.addr %s205, 4
        %s207 = scalar_lea.vmem %s0, %s206
        %p208 = pneg %p85
        %p209 = pneg %p82
        %p210 = scmp.lt.s32.totalorder %s22, 0
        %s211 = scalar_select %p210, %s22, 0
        %s212 = scalar_lea.vmem %s1, %s211
        %p213 = pneg %p111
        %p214 = pneg %p108
        %p215 = pneg %p141
        %p216 = pneg %p138
        %s217 = sand.u32 %s128, 1
        %s218 = scalar_lea.sflag [#allocation3], %s217
        %s219 = sand.u32 %s128, 1
        %s220 = smul.addr %s219, 64
        %s221 = scalar_lea.vmem [#allocation2], %s220
        %s222 = smul.u32 8, %s24
        %p223 = scmp.lt.s32.totalorder %s23, 1
        %s224 = scalar_select %p223, %s23, 1
        %p225 = scmp.lt.s32.totalorder %s222, 7
        %s226 = scalar_select %p225, %s222, 7
        %s227 = smul.addr %s224, 8
        %s228 = sadd.s32 %s226, %s227
        %s229 = smul.addr %s228, 4
        %s230 = scalar_lea.vmem %s2, %s229
        %s231 = smul.u32 8, %s24
        %p232 = scmp.lt.s32.totalorder %s22, 0
        %s233 = scalar_select %p232, %s22, 0
        %s234 = smul.addr %s233, 4
        %s235 = scalar_lea.vmem %s0, %s234
        %p236 = scmp.lt.s32.totalorder %s22, 0
        %s237 = scalar_select %p236, %s22, 0
        %s238 = scalar_lea.vmem %s1, %s237
        %s239 = smul.u32 8, %s24
        %v240 = vld [vmem:[%s230] sm:$0xf]
        %v241 = vunpack.c.l.bf16 %v240
        %v242 = vunpack.c.h.bf16 %v240
        %v243 = vpack.c.bf16 0.0, %v241
        %s245 = ssub.s32 16, 1
        %246 = vst [vmem:[#allocation4] sm:%s245] %v243
        %s247 = scalar_lea.vmem %s230, 4
        %v248 = vld [vmem:[%s247] sm:$0xf]
        %v249 = vunpack.c.l.bf16 %v248
        %v250 = vunpack.c.h.bf16 %v248
        %s251 = scalar_lea.vmem [#allocation4], 4
        %v252 = vpack.c.bf16 0.0, %v249
        %s254 = ssub.s32 16, 1
        %255 = vst [vmem:[%s251] sm:%s254] %v252
        %s256 = scalar_lea.vmem %s230, 8
        %v257 = vld [vmem:[%s256] sm:$0xf]
        %v258 = vunpack.c.l.bf16 %v257
        %v259 = vunpack.c.h.bf16 %v257
        %s260 = scalar_lea.vmem [#allocation4], 8
        %v261 = vpack.c.bf16 0.0, %v258
        %s263 = ssub.s32 16, 1
        %264 = vst [vmem:[%s260] sm:%s263] %v261
        %s265 = scalar_lea.vmem %s230, 12
        %v266 = vld [vmem:[%s265] sm:$0xf]
        %v267 = vunpack.c.l.bf16 %v266
        %v268 = vunpack.c.h.bf16 %v266
        %s269 = scalar_lea.vmem [#allocation4], 12
        %v270 = vpack.c.bf16 0.0, %v267
        %s272 = ssub.s32 16, 1
        %273 = vst [vmem:[%s269] sm:%s272] %v270
        %s274 = scalar_lea.vmem %s230, 16
        %v275 = vld [vmem:[%s274] sm:$0xf]
        %v276 = vunpack.c.l.bf16 %v275
        %v277 = vunpack.c.h.bf16 %v275
        %s278 = scalar_lea.vmem [#allocation4], 16
        %v279 = vpack.c.bf16 0.0, %v276
        %s281 = ssub.s32 16, 1
        %282 = vst [vmem:[%s278] sm:%s281] %v279
        %s283 = scalar_lea.vmem %s230, 20
        %v284 = vld [vmem:[%s283] sm:$0xf]
        %v285 = vunpack.c.l.bf16 %v284
        %v286 = vunpack.c.h.bf16 %v284
        %s287 = scalar_lea.vmem [#allocation4], 20
        %v288 = vpack.c.bf16 0.0, %v285
        %s290 = ssub.s32 16, 1
        %291 = vst [vmem:[%s287] sm:%s290] %v288
        %s292 = scalar_lea.vmem %s230, 24
        %v293 = vld [vmem:[%s292] sm:$0xf]
        %v294 = vunpack.c.l.bf16 %v293
        %v295 = vunpack.c.h.bf16 %v293
        %s296 = scalar_lea.vmem [#allocation4], 24
        %v297 = vpack.c.bf16 0.0, %v294
        %s299 = ssub.s32 16, 1
        %300 = vst [vmem:[%s296] sm:%s299] %v297
        %s301 = scalar_lea.vmem %s230, 28
        %v302 = vld [vmem:[%s301] sm:$0xf]
        %v303 = vunpack.c.l.bf16 %v302
        %v304 = vunpack.c.h.bf16 %v302
        %s305 = scalar_lea.vmem [#allocation4], 28
        %v306 = vpack.c.bf16 0.0, %v303
        %s308 = ssub.s32 16, 1
        %309 = vst [vmem:[%s305] sm:%s308] %v306
        %v311 = vld [vmem:[#allocation4] sm:$0xf]
        %v312 = vld [vmem:[#allocation4 + $0x4] sm:$0xf]
        %v313 = vld [vmem:[#allocation4 + $0x8] sm:$0xf]
        %v314 = vld [vmem:[#allocation4 + $0xc] sm:$0xf]
        %v315 = vld [vmem:[#allocation4 + $0x10] sm:$0xf]
        %v316 = vld [vmem:[#allocation4 + $0x14] sm:$0xf]
        %v317 = vld [vmem:[#allocation4 + $0x18] sm:$0xf]
        %v318 = vld [vmem:[#allocation4 + $0x1c] sm:$0xf]
        %v319 = vld [vmem:[%s235] sm:$0xf]
        %v320 = vld [vmem:[%s235 + $0x4] sm:$0xf]
        %v321 = vld [vmem:[%s235 + $0x8] sm:$0xf]
        %v322 = vld [vmem:[%s235 + $0xc] sm:$0xf]
        %v323 = vld [vmem:[%s235 + $0x10] sm:$0x3]
        %v324 = vld [vmem:[%s238] sm:$0x1]
        %v326 = vperm.slane %v324, 0
        %v336 = vunpack.c.l.b16 %v311
        %v337 = vunpack.c.l.b16 %v312
        %v338 = vunpack.c.l.b16 %v313
        %v339 = vunpack.c.l.b16 %v314
        %v340 = vunpack.c.l.b16 %v315
        %v341 = vunpack.c.l.b16 %v316
        %v342 = vunpack.c.l.b16 %v317
        %v343 = vunpack.c.l.b16 %v318
        %v344 = vpack.c.b16 %v337, %v336
        %v345 = vpack.c.b16 %v339, %v338
        %v346 = vpack.c.b16 %v341, %v340
        %v347 = vpack.c.b16 %v343, %v342
        %v353 = vunpack.c.l.b16 %v319
        %v354 = vunpack.c.l.b16 %v320
        %v355 = vunpack.c.l.b16 %v321
        %v356 = vunpack.c.l.b16 %v322
        %v357 = vunpack.c.l.b16 %v323
        %v358 = vpack.c.b16 %v354, %v353
        %v359 = vpack.c.b16 %v356, %v355
        %v360 = vpack.c.b16 %v357, %v357
        %vm363 = vcmask 293888
        %v365 = vsel %vm363, %v344, 0
        %v368 = vsel %vm363, %v345, 0
        %v371 = vsel %vm363, %v346, 0
        %v374 = vsel %vm363, %v347, 0
        %vm376 = vcmask 1041408
        %v378 = vsel %vm376, %v360, 0
        %380 = vmatpush.bf16.msra.mxu0 0
        %381 = vmatpush.bf16.msra.mxu0 0
        %382 = vmatpush.bf16.msra.mxu0 0
        %383 = vmatpush.bf16.msra.mxu0 0
        %384 = vmatpush.bf16.msra.mxu0 0
        %385 = vmatpush.bf16.msra.mxu0 %v378
        %386 = vmatpush.bf16.msra.mxu0 %v359
        %387 = vmatpush.bf16.msra.mxu0 %v358
        %388 = vmatmul.bf16.gmra.mxu0 %v365
        %v389 = vpop.f32.mrf.mxu0
        %v390 = vadd.f32 %v326, %v389
        %v391 = vpop.f32.mrf.mxu0
        %v392 = vadd.f32 %v326, %v391
        %393 = vmatmul.bf16.gmra.mxu0 %v368
        %v394 = vpop.f32.mrf.mxu0
        %v395 = vadd.f32 %v326, %v394
        %v396 = vpop.f32.mrf.mxu0
        %v397 = vadd.f32 %v326, %v396
        %398 = vmatmul.bf16.gmra.mxu0 %v371
        %v399 = vpop.f32.mrf.mxu0
        %v400 = vadd.f32 %v326, %v399
        %v401 = vpop.f32.mrf.mxu0
        %v402 = vadd.f32 %v326, %v401
        %403 = vmatmul.bf16.gmra.mxu0 %v374
        %v404 = vpop.f32.mrf.mxu0
        %v405 = vadd.f32 %v326, %v404
        %v406 = vpop.f32.mrf.mxu0
        %v407 = vadd.f32 %v326, %v406
        %408 = vdwg.mxu0
        %409 = vst [vmem:[%s221] sm:$0xff] %v390
        %410 = vst [vmem:[%s221 + $0x8] sm:$0xff] %v392
        %411 = vst [vmem:[%s221 + $0x10] sm:$0xff] %v395
        %412 = vst [vmem:[%s221 + $0x18] sm:$0xff] %v397
        %413 = vst [vmem:[%s221 + $0x20] sm:$0xff] %v400
        %414 = vst [vmem:[%s221 + $0x28] sm:$0xff] %v402
        %415 = vst [vmem:[%s221 + $0x30] sm:$0xff] %v405
        %416 = vst [vmem:[%s221 + $0x38] sm:$0xff] %v407
        %s417 = sand.u32 %s128, 1
        %s418 = scalar_lea.sflag [#allocation3], %s417
        %s419 = sand.u32 %s128, 1
        %s420 = smul.addr %s419, 64
        %s421 = scalar_lea.vmem [#allocation2], %s420
        // Predicated region
        $region33: #{downsample_conv_nhwc.2} parent=31 // pred_check
          %p422 = pneg %p138
        $region34: #{downsample_conv_nhwc.2} parent=31 // pred_check_branch
          %424 = sbr.rel (%p422) target = $region36
        $region35: #{downsample_conv_nhwc.2} parent=31 // pred_region
          %s425 = smul.u32 8, %s24
          %427 = vsyncadd %s418, 0
          %s428 = sadd.s32 %s22, %s425
          %s429 = smul.addr %s23, 8
          %s430 = sadd.s32 %s428, %s429
          %s431 = smul.addr %s430, 8
          %s432 = scalar_lea.hbm %s3, %s431
          %s433 = sshll.u32 %s421, 4
          %s434 = int_to_ptr.vmem [resolvable:$true] %s433
          %s435 = sshll.u32 %s432, 4
          %s436 = int_to_ptr.hbm [resolvable:$true] %s435
          %441 = dma.vmem_to_hbm [thread:$0]  %s434, 1024, %s436, %s418, 128, 128, 8
        $region36: #{downsample_conv_nhwc.2} parent=31 // pred_fallthru
          _
      $region32: #{downsample_conv_nhwc.2} parent=5 // pred_fallthru
        _
      %p442 = scmp.le.s32.totalorder 2, %s12
      // Predicated region
      $region37: #{downsample_conv_nhwc.2} parent=5 // pred_check
        %p443 = pneg %p442
      $region38: #{downsample_conv_nhwc.2} parent=5 // pred_check_branch
        %445 = sbr.rel (%p443) target = $region40
      $region39: #{downsample_conv_nhwc.2} parent=5 // pred_region
        %s446 = ssub.s32 %s12, 2
        // Predicated region
        $region41: #{downsample_conv_nhwc.2} parent=39 // pred_check
          %p447 = pneg %p144
        $region42: #{downsample_conv_nhwc.2} parent=39 // pred_check_branch
          %449 = sbr.rel (%p447) target = $region44
        $region43: #{downsample_conv_nhwc.2} parent=39 // pred_region
          %s450 = sand.u32 %s129, 1
          %s451 = scalar_lea.sflag [#allocation3], %s450
          %s452 = sand.u32 %s129, 1
          %s453 = smul.addr %s452, 64
          %s454 = scalar_lea.vmem [#allocation2], %s453
          %456 = dma.done %s451, 1024
        $region44: #{downsample_conv_nhwc.2} parent=39 // pred_fallthru
          _
      $region40: #{downsample_conv_nhwc.2} parent=5 // pred_fallthru
        _
    $region6: #{downsample_conv_nhwc.2} parent=1 // loop_footer
      %s16 = sadd.s32 1, %s12
    $region7: #{downsample_conv_nhwc.2} parent=1 // loop_footer_branch
      %11 = sbr.rel target = $region3
    $region8: #{downsample_conv_nhwc.2} parent=1 // loop_exit
      _
    %457 = vsyncpa [#allocation3], 1
    %s458 = scalar_lea.sflag [#allocation3], 1
    %459 = vsyncpa %s458, 1

</llo_original>
